<compile_context>
chip_gen: v7x
topology: tpu7x:2x2x1
jax: 0.10.0
libtpu: 0.0.40
codegen_flags: <defaults>
</compile_context>

<pallas_src>
import jax
import jax.numpy as jnp
from jax import lax
from jax.experimental import pallas as pl
from jax.experimental.pallas import tpu as pltpu


def _round_up(a, b):
    return ((a + b - 1) // b) * b


def _mxu_tile_rows():
    # v6e / v7x MXUs are 256 wide -> 256-row output tiles; v5e is 128x128.
    try:
        dk = jax.devices()[0].device_kind.lower()
        if "v5 lite" in dk or "v5lite" in dk or "v5e" in dk:
            return 128
    except Exception:
        pass
    return 256


def _make_gather_kernel(TO, TK, L_total, has_tail, use_highest):
    precision = lax.Precision.HIGHEST if use_highest else None

    def kernel(idx_ref, x_ref, o_ref, acc_ref):
        # idx_ref: VMEM (num_out_pad, 1) int32 -- source row per output row (-1 = pad)
        # x_ref:   VMEM (TK, D)               -- one token chunk of this batch element
        # o_ref:   VMEM (TO, D)               -- gathered (prefix + kept) tokens tile
        # acc_ref: VMEM (TO, D) f32           -- accumulator across the K grid axis
        j = pl.program_id(1)
        k = pl.program_id(2)
        n_k = pl.num_programs(2)

        @pl.when(k == 0)
        def _():
            acc_ref[...] = jnp.zeros_like(acc_ref)

        # Indices of this output-row tile, sliced from the per-batch column.
        row0 = pl.multiple_of(j * TO, TO)
        idx_tile = idx_ref[pl.ds(row0, TO), :]                     # (TO, 1)

        # One-hot over this K chunk only: row r has a single 1 at column
        # (idx[r] - k*TK) if that source row lives in this chunk, else all 0.
        col = lax.broadcasted_iota(jnp.int32, (TO, TK), 1) + k * TK
        onehot = (idx_tile == col).astype(x_ref.dtype)             # (TO, TK)

        xc = x_ref[...]                                            # (TK, D)
        if has_tail:
            # Last K chunk is partial: rows past L_total hold unspecified pad
            # data; zero them so (0-weight x NaN) cannot poison the accumulator.
            row_id = lax.broadcasted_iota(jnp.int32, (TK, 1), 0) + k * TK
            xc = jnp.where(row_id < L_total, xc, jnp.zeros_like(xc))

        # 0/1 weights -> exact reproduction of the selected rows (f32 needs
        # HIGHEST precision, otherwise the MXU truncates operands to bf16).
        acc_ref[...] += jnp.dot(onehot, xc,
                                preferred_element_type=jnp.float32,
                                precision=precision)

        @pl.when(k == n_k - 1)
        def _():
            o_ref[...] = acc_ref[...].astype(o_ref.dtype)

    return kernel


def _pallas_gather(x, idx_full):
    """Gather rows of x (B, L_total, D) along axis 1 per idx_full (B, num_out)."""
    B, L_total, D = x.shape
    num_out = idx_full.shape[1]
    itemsize = x.dtype.itemsize
    lane = 128
    Dp = _round_up(D, lane)  # lane padding, for VMEM accounting only

    # ---- output-row tile -----------------------------------------------------
    TO_max = _mxu_tile_rows()
    TO = num_out if num_out <= TO_max else TO_max   # full dim or multiple of 8
    n_j = pl.cdiv(num_out, TO)
    num_out_pad = n_j * TO

    # ---- contraction (token) tile --------------------------------------------
    # Keep each streamed x chunk <= ~2 MiB so the pipeline has small, well
    # overlapped DMAs and total VMEM stays far below v7x's 64 MiB.
    row_bytes = Dp * itemsize
    tk_cap = max(256, min(1024, ((2 << 20) // row_bytes) // 8 * 8))
    TK = L_total if L_total <= tk_cap else tk_cap
    n_k = pl.cdiv(L_total, TK)
    has_tail = (L_total % TK) != 0

    # One lane-padded index column per batch element (block constant across
    # j/k -> DMA'd once per batch).  Pad with -1 so the extra rows of a partial
    # last output tile select nothing (their one-hot rows are all zero).
    idx3 = idx_full.astype(jnp.int32)[:, :, None]
    if num_out_pad != num_out:
        idx3 = jnp.pad(idx3, ((0, 0), (0, num_out_pad - num_out), (0, 0)),
                       constant_values=-1)

    use_highest = x.dtype == jnp.float32
    kernel = _make_gather_kernel(TO, TK, L_total, has_tail, use_highest)

    cost = pl.CostEstimate(
        flops=2 * B * num_out_pad * n_k * TK * D,
        transcendentals=0,
        bytes_accessed=(B * n_j * L_total * D + B * num_out * D) * itemsize
                       + B * num_out_pad * 4,
    )

    # VMEM budget (double-buffered inputs/outputs + scratch + in-kernel
    # temporaries), capped at 48 MiB so the compiler keeps headroom on v7x.
    vmem_needed = (
        2 * TK * Dp * itemsize            # x chunk (double buffered)
        + 2 * TO * Dp * itemsize          # output tile (double buffered)
        + 2 * num_out_pad * lane * 4      # idx column (lane padded, double buffered)
        + TO * Dp * 4                     # f32 accumulator scratch
        + 4 * TO * TK * 4                 # iota / compare / one-hot temporaries
    )
    vmem_limit = int(min(max(vmem_needed + (8 << 20), 32 << 20), 48 << 20))

    return pl.pallas_call(
        kernel,
        out_shape=jax.ShapeDtypeStruct((B, num_out, D), x.dtype),
        grid=(B, n_j, n_k),
        in_specs=[
            # whole (padded) index column, resident per batch element
            pl.BlockSpec((None, num_out_pad, 1), lambda b, j, k: (b, 0, 0)),
            # x streamed in (TK, D) chunks along the contraction axis
            pl.BlockSpec((None, TK, D), lambda b, j, k: (b, k, 0)),
        ],
        out_specs=pl.BlockSpec((None, TO, D), lambda b, j, k: (b, j, 0)),
        scratch_shapes=[pltpu.VMEM((TO, D), jnp.float32)],
        compiler_params=pltpu.CompilerParams(
            # batch and output-row tiles are fully independent (megacore /
            # small-batch v7x); the K axis carries the accumulator.
            dimension_semantics=("parallel", "parallel", "arbitrary"),
            vmem_limit_bytes=vmem_limit,
        ),
        cost_estimate=cost,
    )(idx3, x)


def patch_dropout(x, key, prob, num_prefix_tokens: int = 1, training: bool = True,
                  use_pallas=None):
    """JAX/Pallas equivalent of PatchDropout.forward."""
    assert 0.0 <= prob < 1.0, prob
    if (not training) or prob == 0.0:
        return x

    B, L_total, D = x.shape
    L = L_total - num_prefix_tokens
    num_keep = max(1, int(L * (1.0 - prob)))

    # Random scores + top-k selection (glue; matches torch.randn + topk order).
    rand = jax.random.normal(key, (B, L), dtype=jnp.float32)
    _, keep_indices = lax.top_k(rand, num_keep)  # (B, num_keep)

    if num_prefix_tokens > 0:
        prefix_idx = jnp.broadcast_to(
            jnp.arange(num_prefix_tokens, dtype=jnp.int32)[None, :],
            (B, num_prefix_tokens),
        )
        idx_full = jnp.concatenate(
            [prefix_idx, keep_indices.astype(jnp.int32) + num_prefix_tokens], axis=1
        )
    else:
        idx_full = keep_indices.astype(jnp.int32)
    num_out = idx_full.shape[1]

    if use_pallas is None:
        # Tiny problems: pallas_call launch/step overhead dominates -> XLA gather.
        use_pallas = (jnp.issubdtype(x.dtype, jnp.floating)
                      and (B * num_out * D) >= (1 << 16))
    if not use_pallas:
        return jnp.take_along_axis(x, idx_full[:, :, None], axis=1)

    return _pallas_gather(x, idx_full)


def _reference(x, idx_full):
    # Pure-JAX reference of the gather (same as torch.gather + cat).
    return jnp.take_along_axis(x, idx_full[:, :, None], axis=1)


def _make_indices(key, B, L, prob, num_prefix):
    num_keep = max(1, int(L * (1.0 - prob)))
    rand = jax.random.normal(key, (B, L), dtype=jnp.float32)
    _, keep_indices = lax.top_k(rand, num_keep)
    prefix_idx = jnp.broadcast_to(
        jnp.arange(num_prefix, dtype=jnp.int32)[None, :], (B, num_prefix)
    )
    return jnp.concatenate(
        [prefix_idx, keep_indices.astype(jnp.int32) + num_prefix], axis=1
    )


if __name__ == "__main__":
    # --- small f32 case (single tile in every axis, HIGHEST-precision path) ---
    B, num_prefix, L, D = 2, 1, 16, 32
    prob = 0.5
    L_total = num_prefix + L

    root = jax.random.PRNGKey(0)
    kx, kr = jax.random.split(root)
    x = jax.random.normal(kx, (B, L_total, D), dtype=jnp.float32)

    out = patch_dropout(x, kr, prob, num_prefix_tokens=num_prefix,
                        training=True, use_pallas=True)
    out = jax.block_until_ready(out)

    idx_full = _make_indices(kr, B, L, prob, num_prefix)
    ref = _reference(x, idx_full)
    num_keep = max(1, int(L * (1.0 - prob)))
    assert out.shape == (B, num_prefix + num_keep, D), out.shape
    assert jnp.allclose(out, ref), "Pallas gather mismatch vs reference (f32)"

    # --- bf16 case that exercises TO tiling, K tiling and the tail mask -------
    B2, L2, D2 = 2, 1200, 256
    x2 = jax.random.normal(jax.random.PRNGKey(1), (B2, num_prefix + L2, D2),
                           dtype=jnp.float32).astype(jnp.bfloat16)
    k2 = jax.random.PRNGKey(2)
    out2 = patch_dropout(x2, k2, prob, num_prefix_tokens=num_prefix,
                         training=True, use_pallas=True)
    out2 = jax.block_until_ready(out2)
    idx2 = _make_indices(k2, B2, L2, prob, num_prefix)
    ref2 = _reference(x2, idx2)
    assert out2.shape == ref2.shape, (out2.shape, ref2.shape)
    assert jnp.array_equal(out2, ref2), "Pallas gather mismatch vs reference (bf16 tiled)"

    # Auto-gated path (tiny shape -> XLA fallback) must agree too.
    out_auto = patch_dropout(x, kr, prob, num_prefix_tokens=num_prefix, training=True)
    assert jnp.allclose(out_auto, ref)

    # Eval-mode path (identity) sanity check.
    out_eval = patch_dropout(x, kr, prob, num_prefix_tokens=num_prefix, training=False)
    assert jnp.array_equal(out_eval, x)

    print("KERNEL_OK")
</pallas_src>

<mosaic_0001>
module attributes {stable_mosaic.version = 11 : i64} {
  func.func @kernel(%arg0: i32, %arg1: i32, %arg2: i32, %arg3: memref<1x9x1xi32, #tpu.memory_space<vmem>>, %arg4: memref<1x17x32xf32, #tpu.memory_space<vmem>>, %arg5: memref<1x9x32xf32, #tpu.memory_space<vmem>>, %arg6: memref<9x32xf32, #tpu.memory_space<vmem>>) attributes {dimension_semantics = [#tpu.dimension_semantics<parallel>, #tpu.dimension_semantics<parallel>, #tpu.dimension_semantics<arbitrary>], iteration_bounds = array<i64: 2, 1, 1>, scalar_prefetch = 0 : i64, scratch_operands = 1 : i64, tpu.core_type = #tpu.core_type<tc>, window_params = [{transform_indices = @transform_0, window_bounds = array<i64: 1, 9, 1>}, {transform_indices = @transform_1, window_bounds = array<i64: 1, 17, 32>}, {transform_indices = @transform_2, window_bounds = array<i64: 1, 9, 32>}]} {
    %c0_i32 = arith.constant 0 : i32
    %0 = arith.cmpi eq, %arg2, %c0_i32 : i32
    %1 = arith.extui %0 : i1 to i32
    %c0_i32_0 = arith.constant 0 : i32
    %2 = arith.cmpi ne, %1, %c0_i32_0 : i32
    scf.if %2 {
      %cst_11 = arith.constant 0.000000e+00 : f32
      %25 = vector.broadcast %cst_11 : f32 to vector<9x32xf32>
      %c0_12 = arith.constant 0 : index
      %c0_13 = arith.constant 0 : index
      %26 = vector.load %arg6[%c0_12, %c0_13] : memref<9x32xf32, #tpu.memory_space<vmem>>, vector<9x32xf32>
      tpu.vector_store %arg6[%c0_12, %c0_13], %25 {strides = array<i32>} : memref<9x32xf32, #tpu.memory_space<vmem>>, vector<9x32xf32>,
    } else {
    }
    %c9_i32 = arith.constant 9 : i32
    %3 = arith.muli %arg1, %c9_i32 : i32
    %4 = tpu.assume_multiple %3, 9 : i32
    %c0 = arith.constant 0 : index
    %5 = arith.index_cast %4 : i32 to index
    %c0_1 = arith.constant 0 : index
    %6 = vector.load %arg3[%c0, %5, %c0_1] : memref<1x9x1xi32, #tpu.memory_space<vmem>>, vector<1x9x1xi32>
    %7 = vector.shape_cast %6 : vector<1x9x1xi32> to vector<9x1xi32>
    %8 = tpu.iota {dimensions = array<i32: 1>} : vector<9x17xi32>
    %c17_i32 = arith.constant 17 : i32
    %9 = arith.muli %arg2, %c17_i32 : i32
    %10 = vector.broadcast %9 : i32 to vector<9x17xi32>
    %11 = arith.addi %8, %10 : vector<9x17xi32>
    %12 = vector.broadcast %7 : vector<9x1xi32> to vector<9x17xi32>
    %13 = arith.cmpi eq, %12, %11 : vector<9x17xi32>
    %14 = arith.extui %13 : vector<9x17xi1> to vector<9x17xi32>
    %15 = arith.sitofp %14 : vector<9x17xi32> to vector<9x17xf32>
    %c0_2 = arith.constant 0 : index
    %c0_3 = arith.constant 0 : index
    %c0_4 = arith.constant 0 : index
    %16 = vector.load %arg4[%c0_2, %c0_3, %c0_4] : memref<1x17x32xf32, #tpu.memory_space<vmem>>, vector<1x17x32xf32>
    %17 = vector.shape_cast %16 : vector<1x17x32xf32> to vector<17x32xf32>
    %c0_5 = arith.constant 0 : index
    %c0_6 = arith.constant 0 : index
    %18 = vector.load %arg6[%c0_5, %c0_6] : memref<9x32xf32, #tpu.memory_space<vmem>>, vector<9x32xf32>
    %cst = arith.constant dense<0.000000e+00> : vector<9x32xf32>
    %19 = tpu.matmul %15, %17, %cst {dimension_numbers = #tpu.dot_dimension_numbers<[1], [0], [0], [1], [0, 0, 1, 1], [], []>, precision = #tpu.contract_precision<fp32>} : vector<9x17xf32>, vector<17x32xf32>, vector<9x32xf32> -> vector<9x32xf32>
    %20 = arith.addf %18, %19 : vector<9x32xf32>
    %c0_7 = arith.constant 0 : index
    %c0_8 = arith.constant 0 : index
    %21 = vector.load %arg6[%c0_7, %c0_8] : memref<9x32xf32, #tpu.memory_space<vmem>>, vector<9x32xf32>
    tpu.vector_store %arg6[%c0_7, %c0_8], %20 {strides = array<i32>} : memref<9x32xf32, #tpu.memory_space<vmem>>, vector<9x32xf32>,
    %c0_i32_9 = arith.constant 0 : i32
    %22 = arith.cmpi eq, %arg2, %c0_i32_9 : i32
    %23 = arith.extui %22 : i1 to i32
    %c0_i32_10 = arith.constant 0 : i32
    %24 = arith.cmpi ne, %23, %c0_i32_10 : i32
    scf.if %24 {
      %c0_11 = arith.constant 0 : index
      %c0_12 = arith.constant 0 : index
      %25 = vector.load %arg6[%c0_11, %c0_12] : memref<9x32xf32, #tpu.memory_space<vmem>>, vector<9x32xf32>
      %c0_13 = arith.constant 0 : index
      %c0_14 = arith.constant 0 : index
      %c0_15 = arith.constant 0 : index
      %26 = vector.load %arg5[%c0_13, %c0_14, %c0_15] : memref<1x9x32xf32, #tpu.memory_space<vmem>>, vector<1x9x32xf32>
      %27 = vector.shape_cast %26 : vector<1x9x32xf32> to vector<9x32xf32>
      %28 = vector.shape_cast %25 : vector<9x32xf32> to vector<1x9x32xf32>
      tpu.vector_store %arg5[%c0_13, %c0_14, %c0_15], %28 {strides = array<i32>} : memref<1x9x32xf32, #tpu.memory_space<vmem>>, vector<1x9x32xf32>,
    } else {
    }
    return
  }
  func.func @transform_0(%arg0: i32, %arg1: i32, %arg2: i32) -> (i32, i32, i32) {
    %c0_i32 = arith.constant 0 : i32
    %c0_i32_0 = arith.constant 0 : i32
    %c0_i32_1 = arith.constant 0 : i32
    return %arg0, %c0_i32, %c0_i32_0 : i32, i32, i32
  }
  func.func @transform_1(%arg0: i32, %arg1: i32, %arg2: i32) -> (i32, i32, i32) {
    %c0_i32 = arith.constant 0 : i32
    %c0_i32_0 = arith.constant 0 : i32
    return %arg0, %arg2, %c0_i32 : i32, i32, i32
  }
  func.func @transform_2(%arg0: i32, %arg1: i32, %arg2: i32) -> (i32, i32, i32) {
    %c0_i32 = arith.constant 0 : i32
    %c0_i32_0 = arith.constant 0 : i32
    return %arg0, %arg1, %c0_i32 : i32, i32, i32
  }
}

</mosaic_0001>

<llo_original>
// kernel: tpu_custom_call.1
$region0: #{tpu_custom_call.1}
  #allocation0 [shape = 'u32[]', space=smem, size = 0x4, offset = 0x4, fixed_abs, tag = 'smem constant byte address 0x4 - core index']
  #allocation1 [shape = 'u32[144,128]{1,0:T(1,128)}', space=vmem, size = 0x12000, scoped, tag = 'internal scratch']
  #allocation2 [shape = 'f32[9,32]{1,0:T(8,128)}', space=vmem, size = 0x2000, scoped, tag = 'scratch operand']
  %s0 = inlined_call_operand.vmem [shape: s32[2,9,1], index: 0, kind: input, shape index: {}]
  %s1 = inlined_call_operand.vmem [shape: f32[2,17,32], index: 1, kind: input, shape index: {}]
  %s2 = inlined_call_operand.vmem [shape: f32[2,9,32], index: 2, kind: output, shape index: {}]
  %s3 = sld [smem:[#allocation0]]
  $region49: #{tpu_custom_call.1} parent=0
    _
  %s5 = ssub.s32 1, %s3
  %s6 = scalar_select 0, %s5, %s3
  loop: start=0, step=1, limit=4
  $region2: #{tpu_custom_call.1} parent=0 // loop_pre_header
    _
  $region3: #{tpu_custom_call.1} parent=0 // loop_header
    %s8 = sphi 0, %s12
    %p9 = scmp.ge.s32.totalorder %s8, 4
    %s15 = sphi 0, %s34
    %s16 = sphi 0, %s30
    %s17 = sphi 0, %s26
    %s18 = sphi 0, %s15
    %s19 = sphi 0, %s16
    %s20 = sphi 0, %s17
    %s21 = sphi 0, %s18
    %s22 = sphi 0, %s19
    %s23 = sphi 0, %s20
    %s37 = sphi 0, %s39
    %s40 = sphi 0, %s37
    %s41 = sphi 0, %s40
    %s57 = sphi 0, %s41
    %s65 = sphi 0, %s67
    %s68 = sphi 0, %s65
    %s69 = sphi 0, %s68
    %s85 = sphi 0, %s69
    %s93 = sphi 0, %s95
    %s96 = sphi 0, %s93
    %s97 = sphi 0, %s96
    %s113 = sphi 0, %s97
  $region4: #{tpu_custom_call.1} parent=0 // loop_header_branch
    %11 = sbr.rel (%p9) target = $region8
  $region5: #{tpu_custom_call.1} parent=0 // loop_body
    %s13 = ssub.s32 %s8, 1
    %s14 = ssub.s32 %s8, 2
    %s24 = sadd.s32 1, %s17
    %p25 = scmp.ge.s32.totalorder %s24, 1
    %s26 = scalar_select %p25, 0, %s24
    %s27 = sadd.s32 1, %s16
    %s28 = scalar_select %p25, %s27, %s16
    %p29 = scmp.ge.s32.totalorder %s28, 1
    %s30 = scalar_select %p29, 0, %s28
    %s31 = sadd.s32 1, %s15
    %s32 = scalar_select %p29, %s31, %s15
    %p33 = scmp.ge.s32.totalorder %s32, 2
    %s34 = scalar_select %p33, 0, %s32
    %s35 = ssub.s32 %s15, %s34
    %p36 = scmp.eq.s32.totalorder %s35, 0
    %s38 = sadd.s32 %s37, 1
    %s39 = scalar_select %p36, %s37, %s38
    %p42 = pneg %p36
    %p43 = scmp.eq.s32.totalorder %s8, 1
    %p44 = por %p42, %p43
    %p45 = scmp.ne.s32.totalorder %s37, %s40
    %p46 = scmp.eq.s32.totalorder %s8, 0
    %p47 = por %p45, %p46
    %p48 = scmp.ne.s32.totalorder %s37, %s40
    %p49 = scmp.eq.s32.totalorder %s13, 1
    %p50 = por %p48, %p49
    %p51 = scmp.ne.s32.totalorder %s40, %s41
    %p52 = scmp.eq.s32.totalorder %s13, 0
    %p53 = por %p51, %p52
    %p54 = scmp.ne.s32.totalorder %s40, %s41
    %p55 = scmp.eq.s32.totalorder %s14, 1
    %p56 = por %p54, %p55
    %p58 = scmp.ne.s32.totalorder %s41, %s57
    %p59 = scmp.eq.s32.totalorder %s14, 0
    %p60 = por %p58, %p59
    %s61 = ssub.s32 %s15, %s34
    %s62 = ssub.s32 %s17, %s26
    %s63 = sor.u32 %s61, %s62
    %p64 = scmp.eq.s32.totalorder %s63, 0
    %s66 = sadd.s32 %s65, 1
    %s67 = scalar_select %p64, %s65, %s66
    %p70 = pneg %p64
    %p71 = scmp.eq.s32.totalorder %s8, 1
    %p72 = por %p70, %p71
    %p73 = scmp.ne.s32.totalorder %s65, %s68
    %p74 = scmp.eq.s32.totalorder %s8, 0
    %p75 = por %p73, %p74
    %p76 = scmp.ne.s32.totalorder %s65, %s68
    %p77 = scmp.eq.s32.totalorder %s13, 1
    %p78 = por %p76, %p77
    %p79 = scmp.ne.s32.totalorder %s68, %s69
    %p80 = scmp.eq.s32.totalorder %s13, 0
    %p81 = por %p79, %p80
    %p82 = scmp.ne.s32.totalorder %s68, %s69
    %p83 = scmp.eq.s32.totalorder %s14, 1
    %p84 = por %p82, %p83
    %p86 = scmp.ne.s32.totalorder %s69, %s85
    %p87 = scmp.eq.s32.totalorder %s14, 0
    %p88 = por %p86, %p87
    %s89 = ssub.s32 %s15, %s34
    %s90 = ssub.s32 %s16, %s30
    %s91 = sor.u32 %s89, %s90
    %p92 = scmp.eq.s32.totalorder %s91, 0
    %s94 = sadd.s32 %s93, 1
    %s95 = scalar_select %p92, %s93, %s94
    %p98 = pneg %p92
    %p99 = scmp.eq.s32.totalorder %s8, 1
    %p100 = por %p98, %p99
    %p101 = scmp.ne.s32.totalorder %s93, %s96
    %p102 = scmp.eq.s32.totalorder %s8, 0
    %p103 = por %p101, %p102
    %p104 = scmp.ne.s32.totalorder %s93, %s96
    %p105 = scmp.eq.s32.totalorder %s13, 1
    %p106 = por %p104, %p105
    %p107 = scmp.ne.s32.totalorder %s96, %s97
    %p108 = scmp.eq.s32.totalorder %s13, 0
    %p109 = por %p107, %p108
    %p110 = scmp.ne.s32.totalorder %s96, %s97
    %p111 = scmp.eq.s32.totalorder %s14, 1
    %p112 = por %p110, %p111
    %p114 = scmp.ne.s32.totalorder %s97, %s113
    %p115 = scmp.eq.s32.totalorder %s14, 0
    %p116 = por %p114, %p115
    %p117 = scmp.le.s32.totalorder 1, %s8
    %p118 = scmp.lt.s32.totalorder %s8, 3
    %p119 = pnand %p117, %p118
    %p120 = pneg %p119
    // Predicated region
    $region9: #{tpu_custom_call.1} parent=5 // pred_check
      _
    $region10: #{tpu_custom_call.1} parent=5 // pred_check_branch
      %122 = sbr.rel (%p119) target = $region12
    $region11: #{tpu_custom_call.1} parent=5 // pred_region
      %s123 = ssub.s32 %s8, 1
    $region12: #{tpu_custom_call.1} parent=5 // pred_fallthru
      _
    %p124 = scmp.lt.s32.totalorder %s8, 2
    // Predicated region
    $region13: #{tpu_custom_call.1} parent=5 // pred_check
      %p125 = pneg %p124
    $region14: #{tpu_custom_call.1} parent=5 // pred_check_branch
      %127 = sbr.rel (%p125) target = $region16
    $region15: #{tpu_custom_call.1} parent=5 // pred_region
      // Predicated region
      $region17: #{tpu_custom_call.1} parent=15 // pred_check
        %p128 = pneg %p47
      $region18: #{tpu_custom_call.1} parent=15 // pred_check_branch
        %130 = sbr.rel (%p128) target = $region20
      $region19: #{tpu_custom_call.1} parent=15 // pred_region
        %p131 = scmp.lt.s32.totalorder %s15, 1
        %s132 = scalar_select %p131, %s15, 1
        %s133 = smul.addr %s132, 2
        %s134 = smul.addr %s133, 8
        %s135 = scalar_lea.vmem %s0, %s134
      $region20: #{tpu_custom_call.1} parent=15 // pred_fallthru
        _
      // Predicated region
      $region21: #{tpu_custom_call.1} parent=15 // pred_check
        %p136 = pneg %p75
      $region22: #{tpu_custom_call.1} parent=15 // pred_check_branch
        %138 = sbr.rel (%p136) target = $region24
      $region23: #{tpu_custom_call.1} parent=15 // pred_region
        %s139 = smul.u32 3, %s17
        %p140 = scmp.lt.s32.totalorder %s15, 1
        %s141 = scalar_select %p140, %s15, 1
        %p142 = scmp.lt.s32.totalorder %s139, 2
        %s143 = scalar_select %p142, %s139, 2
        %s144 = smul.addr %s141, 3
        %s145 = sadd.s32 %s143, %s144
        %s146 = smul.addr %s145, 8
        %s147 = scalar_lea.vmem %s1, %s146
        %s148 = smul.u32 3, %s17
      $region24: #{tpu_custom_call.1} parent=15 // pred_fallthru
        _
    $region16: #{tpu_custom_call.1} parent=5 // pred_fallthru
      _
    %p149 = scmp.le.s32.totalorder 1, %s8
    %p150 = scmp.lt.s32.totalorder %s8, 3
    %p151 = pnand %p149, %p150
    %p152 = pneg %p151
    // Predicated region
    $region25: #{tpu_custom_call.1} parent=5 // pred_check
      _
    $region26: #{tpu_custom_call.1} parent=5 // pred_check_branch
      %154 = sbr.rel (%p151) target = $region28
    $region27: #{tpu_custom_call.1} parent=5 // pred_region
      %s155 = ssub.s32 %s8, 1
      %p156 = scmp.lt.s32.totalorder %s18, 1
      %s157 = scalar_select %p156, %s18, 1
      %s158 = smul.addr %s157, 2
      %s159 = smul.addr %s158, 8
      %s160 = scalar_lea.vmem %s0, %s159
      %p161 = pneg %p53
      %p162 = pneg %p50
      %s163 = smul.u32 3, %s20
      %p164 = scmp.lt.s32.totalorder %s18, 1
      %s165 = scalar_select %p164, %s18, 1
      %p166 = scmp.lt.s32.totalorder %s163, 2
      %s167 = scalar_select %p166, %s163, 2
      %s168 = smul.addr %s165, 3
      %s169 = sadd.s32 %s167, %s168
      %s170 = smul.addr %s169, 8
      %s171 = scalar_lea.vmem %s1, %s170
      %p172 = pneg %p81
      %p173 = pneg %p78
      %p174 = pneg %p109
      %p175 = pneg %p106
      %s176 = smul.u32 2, %s19
      %p177 = scmp.lt.s32.totalorder %s18, 1
      %s178 = scalar_select %p177, %s18, 1
      %p179 = scmp.lt.s32.totalorder %s176, 1
      %s180 = scalar_select %p179, %s176, 1
      %s181 = smul.addr %s178, 2
      %s182 = sadd.s32 %s180, %s181
      %s183 = smul.addr %s182, 8
      %s184 = scalar_lea.vmem %s2, %s183
      %p185 = scmp.lt.s32.totalorder %s18, 1
      %s186 = scalar_select %p185, %s18, 1
      %s187 = smul.addr %s186, 2
      %s188 = smul.addr %s187, 8
      %s189 = scalar_lea.vmem %s0, %s188
      %s190 = smul.u32 3, %s20
      %p191 = scmp.lt.s32.totalorder %s18, 1
      %s192 = scalar_select %p191, %s18, 1
      %p193 = scmp.lt.s32.totalorder %s190, 2
      %s194 = scalar_select %p193, %s190, 2
      %s195 = smul.addr %s192, 3
      %s196 = sadd.s32 %s194, %s195
      %s197 = smul.addr %s196, 8
      %s198 = scalar_lea.vmem %s1, %s197
      %s199 = smul.u32 3, %s20
      %s200 = smul.u32 2, %s19
      %p201 = scmp.lt.s32.totalorder %s18, 1
      %s202 = scalar_select %p201, %s18, 1
      %p203 = scmp.lt.s32.totalorder %s200, 1
      %s204 = scalar_select %p203, %s200, 1
      %s205 = smul.addr %s202, 2
      %s206 = sadd.s32 %s204, %s205
      %s207 = smul.addr %s206, 8
      %s208 = scalar_lea.vmem %s2, %s207
      %s209 = smul.u32 2, %s19
      %p210 = scmp.eq.s32.totalorder %s20, 0
      // Predicated region
      $region29: #{tpu_custom_call.1} parent=27 // pred_check
        %p211 = pneg %p210
      $region30: #{tpu_custom_call.1} parent=27 // pred_check_branch
        %213 = sbr.rel (%p211) target = $region32
      $region31: #{tpu_custom_call.1} parent=27 // pred_region
        %vm214 = vcmask 261120
        %215 = vst.msk [vmem:[#allocation2] sm:$0xff] %vm214, 0.0
        %vm216 = vcmask 253952
        %217 = vst.msk [vmem:[#allocation2 + $0x8] sm:$0x1] %vm216, 0.0
      $region32: #{tpu_custom_call.1} parent=27 // pred_fallthru
        _
      %s218 = smul.u32 %s19, 9
      %s219 = scalar_lea.vmem %s189, %s218
      %v220 = vld [vmem:[%s219] sm:$0xff]
      %v221 = vld [vmem:[%s219 + $0x8] sm:$0x1]
      %v222 = vlaneseq
      %v223 = vand.u32 %v222, 127
      %s224 = smul.u32 %s20, 17
      %v225 = vstv %s224
      %v226 = vadd.s32 %v223, %v225
      %227 = vset.pattern.permute.xlu0 0
      %228 = vperm.xlu0 %227, %v220
      %v229 = vpop.permute.xlu0 %228
      %230 = vset.pattern.permute.xlu0 0
      %231 = vperm.xlu0 %230, %v221
      %v232 = vpop.permute.xlu0 %231
      %vm233 = vcmp.eq.s32.totalorder %v229, %v226
      %vm234 = vcmp.eq.s32.totalorder %v232, %v226
      %v235 = vsel %vm233, 1, 0
      %v236 = vsel %vm234, 1, 0
      %v237 = vcvt.s32.f32 %v235
      %v238 = vcvt.s32.f32 %v236
      %v239 = vld [vmem:[%s198] sm:$0xff]
      %v240 = vld [vmem:[%s198 + $0x8] sm:$0xff]
      %v241 = vld [vmem:[%s198 + $0x10] sm:$0x1]
      %v242 = vld [vmem:[#allocation2] sm:$0xff]
      %v243 = vld [vmem:[#allocation2 + $0x8] sm:$0x1]
      %vm244 = vcmask 138240
      %v246 = vsel %vm244, %v237, 0
      %v249 = vsel %vm244, %v238, 0
      %vm251 = vcmask 1040384
      %v253 = vsel %vm251, %v241, 0
      %255 = vmatprep.subr.mxu0 0.0
      %v256 = vand.u32 %v239, 4294901760
      %257 = vmatpush1.msra.mxu0 %v256
      %258 = vmatprep.subr.mxu0 0.0
      %v259 = vand.u32 %v240, 4294901760
      %260 = vmatpush1.msra.mxu0 %v259
      %261 = vmatprep.subr.mxu0 0.0
      %v262 = vand.u32 %v253, 4294901760
      %263 = vmatpush1.msra.mxu0 %v262
      %264 = vmatprep.subr.mxu0 0.0
      %265 = vmatpush1.msra.mxu0 0.0
      %266 = vmatprep.subr.mxu0 0.0
      %267 = vmatpush1.msra.mxu0 0.0
      %268 = vmatprep.subr.mxu0 0.0
      %269 = vmatpush1.msra.mxu0 0.0
      %270 = vmatprep.subr.mxu0 0.0
      %271 = vmatpush1.msra.mxu0 0.0
      %272 = vmatprep.subr.mxu0 0.0
      %273 = vmatpush1.msra.mxu0 0.0
      %274 = vmatprep.subr.mxu0 0.0
      %275 = vmatpush1.msra.mxu0 0.0
      %276 = vmatprep.subr.mxu0 0.0
      %277 = vmatpush1.msra.mxu0 0.0
      %278 = vmatprep.subr.mxu0 0.0
      %279 = vmatpush1.msra.mxu0 0.0
      %280 = vmatprep.subr.mxu0 0.0
      %281 = vmatpush1.msra.mxu0 0.0
      %282 = vmatprep.subr.mxu0 0.0
      %283 = vmatpush1.msra.mxu0 0.0
      %284 = vmatprep.subr.mxu0 0.0
      %285 = vmatpush1.msra.mxu0 0.0
      %286 = vmatprep.subr.mxu0 0.0
      %287 = vmatpush1.msra.mxu0 0.0
      %288 = vmatprep.subr.mxu0 0.0
      %289 = vmatpush1.msra.mxu0 0.0
      %290 = vmatprep.subr.mxu0 0.0
      %291 = vmatpush1.msra.mxu0 0.0
      %292 = vmatprep.subr.mxu0 0.0
      %293 = vmatpush1.msra.mxu0 0.0
      %294 = vmatprep.subr.mxu0 0.0
      %295 = vmatpush1.msra.mxu0 0.0
      %296 = vmatprep.subr.mxu0 0.0
      %297 = vmatpush1.msra.mxu0 0.0
      %298 = vmatprep.subr.mxu0 0.0
      %299 = vmatpush1.msra.mxu0 0.0
      %300 = vmatprep.subr.mxu0 0.0
      %301 = vmatpush1.msra.mxu0 0.0
      %302 = vmatprep.subr.mxu0 0.0
      %303 = vmatpush1.msra.mxu0 0.0
      %304 = vmatprep.subr.mxu0 0.0
      %305 = vmatpush1.msra.mxu0 0.0
      %306 = vmatprep.subr.mxu0 0.0
      %307 = vmatpush1.msra.mxu0 0.0
      %308 = vmatprep.subr.mxu0 0.0
      %309 = vmatpush1.msra.mxu0 0.0
      %310 = vmatprep.subr.mxu0 0.0
      %311 = vmatpush1.msra.mxu0 0.0
      %312 = vmatprep.subr.mxu0 0.0
      %313 = vmatpush1.msra.mxu0 0.0
      %314 = vmatprep.subr.mxu0 0.0
      %315 = vmatpush1.msra.mxu0 0.0
      %316 = vmatprep.subr.mxu0 0.0
      %317 = vmatpush1.msra.mxu0 0.0
      %318 = vmatprep.subr.mxu0 0.0
      %319 = vmatpush1.msra.mxu0 0.0
      %320 = vmatprep.subr.mxu0 0.0
      %321 = vmatpush1.msra.mxu0 0.0
      %322 = vmatprep.mubr.f32.mxu0 0.0
      %v323 = vand.u32 %v246, 4294901760
      %v324 = vsub.f32 %v246, %v323
      %v325 = vand.u32 %v324, 4294901760
      %v326 = vsub.f32 %v324, %v325
      %v327 = vand.u32 %v326, 4294901760
      %328 = vmatmul.mubr.f32.gmra.mrb[0].mxu0 %v327
      %v329 = vpop.f32.mrb[0].mxu0
      %v330 = vadd.f32 0.0, %v329
      %v331 = vpop.f32.mrb[0].mxu0
      %332 = vmatprep.mubr.f32.mxu0 0.0
      %v333 = vand.u32 %v249, 4294901760
      %v334 = vsub.f32 %v249, %v333
      %v335 = vand.u32 %v334, 4294901760
      %v336 = vsub.f32 %v334, %v335
      %v337 = vand.u32 %v336, 4294901760
      %338 = vmatmul.mubr.f32.gmra.mrb[0].mxu0 %v337
      %v339 = vpop.f32.mrb[0].mxu0
      %v340 = vadd.f32 0.0, %v339
      %v341 = vpop.f32.mrb[0].mxu0
      %342 = vdwg.mxu0
      %343 = vmatprep.subr.mxu0 0.0
      %v344 = vand.u32 %v239, 4294901760
      %v345 = vsub.f32 %v239, %v344
      %v346 = vand.u32 %v345, 4294901760
      %v347 = vsub.f32 %v345, %v346
      %v348 = vand.u32 %v347, 4294901760
      %349 = vmatpush1.msra.mxu0 %v348
      %350 = vmatprep.subr.mxu0 0.0
      %v351 = vand.u32 %v240, 4294901760
      %v352 = vsub.f32 %v240, %v351
      %v353 = vand.u32 %v352, 4294901760
      %v354 = vsub.f32 %v352, %v353
      %v355 = vand.u32 %v354, 4294901760
      %356 = vmatpush1.msra.mxu0 %v355
      %357 = vmatprep.subr.mxu0 0.0
      %v358 = vand.u32 %v253, 4294901760
      %v359 = vsub.f32 %v253, %v358
      %v360 = vand.u32 %v359, 4294901760
      %v361 = vsub.f32 %v359, %v360
      %v362 = vand.u32 %v361, 4294901760
      %363 = vmatpush1.msra.mxu0 %v362
      %364 = vmatprep.subr.mxu0 0.0
      %365 = vmatpush1.msra.mxu0 0.0
      %366 = vmatprep.subr.mxu0 0.0
      %367 = vmatpush1.msra.mxu0 0.0
      %368 = vmatprep.subr.mxu0 0.0
      %369 = vmatpush1.msra.mxu0 0.0
      %370 = vmatprep.subr.mxu0 0.0
      %371 = vmatpush1.msra.mxu0 0.0
      %372 = vmatprep.subr.mxu0 0.0
      %373 = vmatpush1.msra.mxu0 0.0
      %374 = vmatprep.subr.mxu0 0.0
      %375 = vmatpush1.msra.mxu0 0.0
      %376 = vmatprep.subr.mxu0 0.0
      %377 = vmatpush1.msra.mxu0 0.0
      %378 = vmatprep.subr.mxu0 0.0
      %379 = vmatpush1.msra.mxu0 0.0
      %380 = vmatprep.subr.mxu0 0.0
      %381 = vmatpush1.msra.mxu0 0.0
      %382 = vmatprep.subr.mxu0 0.0
      %383 = vmatpush1.msra.mxu0 0.0
      %384 = vmatprep.subr.mxu0 0.0
      %385 = vmatpush1.msra.mxu0 0.0
      %386 = vmatprep.subr.mxu0 0.0
      %387 = vmatpush1.msra.mxu0 0.0
      %388 = vmatprep.subr.mxu0 0.0
      %389 = vmatpush1.msra.mxu0 0.0
      %390 = vmatprep.subr.mxu0 0.0
      %391 = vmatpush1.msra.mxu0 0.0
      %392 = vmatprep.subr.mxu0 0.0
      %393 = vmatpush1.msra.mxu0 0.0
      %394 = vmatprep.subr.mxu0 0.0
      %395 = vmatpush1.msra.mxu0 0.0
      %396 = vmatprep.subr.mxu0 0.0
      %397 = vmatpush1.msra.mxu0 0.0
      %398 = vmatprep.subr.mxu0 0.0
      %399 = vmatpush1.msra.mxu0 0.0
      %400 = vmatprep.subr.mxu0 0.0
      %401 = vmatpush1.msra.mxu0 0.0
      %402 = vmatprep.subr.mxu0 0.0
      %403 = vmatpush1.msra.mxu0 0.0
      %404 = vmatprep.subr.mxu0 0.0
      %405 = vmatpush1.msra.mxu0 0.0
      %406 = vmatprep.subr.mxu0 0.0
      %407 = vmatpush1.msra.mxu0 0.0
      %408 = vmatprep.subr.mxu0 0.0
      %409 = vmatpush1.msra.mxu0 0.0
      %410 = vmatprep.subr.mxu0 0.0
      %411 = vmatpush1.msra.mxu0 0.0
      %412 = vmatprep.subr.mxu0 0.0
      %413 = vmatpush1.msra.mxu0 0.0
      %414 = vmatprep.subr.mxu0 0.0
      %415 = vmatpush1.msra.mxu0 0.0
      %416 = vmatprep.subr.mxu0 0.0
      %417 = vmatpush1.msra.mxu0 0.0
      %418 = vmatprep.subr.mxu0 0.0
      %419 = vmatpush1.msra.mxu0 0.0
      %420 = vmatprep.subr.mxu0 0.0
      %421 = vmatpush1.msra.mxu0 0.0
      %422 = vmatprep.mubr.f32.mxu0 0.0
      %v423 = vand.u32 %v246, 4294901760
      %424 = vmatmul.mubr.f32.gmra.mrb[0].mxu0 %v423
      %v425 = vpop.f32.mrb[0].mxu0
      %v426 = vadd.f32 %v330, %v425
      %v427 = vpop.f32.mrb[0].mxu0
      %428 = vmatprep.mubr.f32.mxu0 0.0
      %v429 = vand.u32 %v249, 4294901760
      %430 = vmatmul.mubr.f32.gmra.mrb[0].mxu0 %v429
      %v431 = vpop.f32.mrb[0].mxu0
      %v432 = vadd.f32 %v340, %v431
      %v433 = vpop.f32.mrb[0].mxu0
      %434 = vdwg.mxu0
      %435 = vmatprep.subr.mxu0 0.0
      %v436 = vand.u32 %v239, 4294901760
      %v437 = vsub.f32 %v239, %v436
      %438 = vmatpush1.msra.mxu0 %v437
      %439 = vmatprep.subr.mxu0 0.0
      %v440 = vand.u32 %v240, 4294901760
      %v441 = vsub.f32 %v240, %v440
      %442 = vmatpush1.msra.mxu0 %v441
      %443 = vmatprep.subr.mxu0 0.0
      %v444 = vand.u32 %v253, 4294901760
      %v445 = vsub.f32 %v253, %v444
      %446 = vmatpush1.msra.mxu0 %v445
      %447 = vmatprep.subr.mxu0 0.0
      %448 = vmatpush1.msra.mxu0 0.0
      %449 = vmatprep.subr.mxu0 0.0
      %450 = vmatpush1.msra.mxu0 0.0
      %451 = vmatprep.subr.mxu0 0.0
      %452 = vmatpush1.msra.mxu0 0.0
      %453 = vmatprep.subr.mxu0 0.0
      %454 = vmatpush1.msra.mxu0 0.0
      %455 = vmatprep.subr.mxu0 0.0
      %456 = vmatpush1.msra.mxu0 0.0
      %457 = vmatprep.subr.mxu0 0.0
      %458 = vmatpush1.msra.mxu0 0.0
      %459 = vmatprep.subr.mxu0 0.0
      %460 = vmatpush1.msra.mxu0 0.0
      %461 = vmatprep.subr.mxu0 0.0
      %462 = vmatpush1.msra.mxu0 0.0
      %463 = vmatprep.subr.mxu0 0.0
      %464 = vmatpush1.msra.mxu0 0.0
      %465 = vmatprep.subr.mxu0 0.0
      %466 = vmatpush1.msra.mxu0 0.0
      %467 = vmatprep.subr.mxu0 0.0
      %468 = vmatpush1.msra.mxu0 0.0
      %469 = vmatprep.subr.mxu0 0.0
      %470 = vmatpush1.msra.mxu0 0.0
      %471 = vmatprep.subr.mxu0 0.0
      %472 = vmatpush1.msra.mxu0 0.0
      %473 = vmatprep.subr.mxu0 0.0
      %474 = vmatpush1.msra.mxu0 0.0
      %475 = vmatprep.subr.mxu0 0.0
      %476 = vmatpush1.msra.mxu0 0.0
      %477 = vmatprep.subr.mxu0 0.0
      %478 = vmatpush1.msra.mxu0 0.0
      %479 = vmatprep.subr.mxu0 0.0
      %480 = vmatpush1.msra.mxu0 0.0
      %481 = vmatprep.subr.mxu0 0.0
      %482 = vmatpush1.msra.mxu0 0.0
      %483 = vmatprep.subr.mxu0 0.0
      %484 = vmatpush1.msra.mxu0 0.0
      %485 = vmatprep.subr.mxu0 0.0
      %486 = vmatpush1.msra.mxu0 0.0
      %487 = vmatprep.subr.mxu0 0.0
      %488 = vmatpush1.msra.mxu0 0.0
      %489 = vmatprep.subr.mxu0 0.0
      %490 = vmatpush1.msra.mxu0 0.0
      %491 = vmatprep.subr.mxu0 0.0
      %492 = vmatpush1.msra.mxu0 0.0
      %493 = vmatprep.subr.mxu0 0.0
      %494 = vmatpush1.msra.mxu0 0.0
      %495 = vmatprep.subr.mxu0 0.0
      %496 = vmatpush1.msra.mxu0 0.0
      %497 = vmatprep.subr.mxu0 0.0
      %498 = vmatpush1.msra.mxu0 0.0
      %499 = vmatprep.subr.mxu0 0.0
      %500 = vmatpush1.msra.mxu0 0.0
      %501 = vmatprep.subr.mxu0 0.0
      %502 = vmatpush1.msra.mxu0 0.0
      %503 = vmatprep.subr.mxu0 0.0
      %504 = vmatpush1.msra.mxu0 0.0
      %505 = vmatprep.mubr.f32.mxu0 0.0
      %v506 = vand.u32 %v246, 4294901760
      %v507 = vsub.f32 %v246, %v506
      %508 = vmatmul.mubr.f32.gmra.mrb[0].mxu0 %v507
      %v509 = vpop.f32.mrb[0].mxu0
      %v510 = vadd.f32 %v426, %v509
      %v511 = vpop.f32.mrb[0].mxu0
      %512 = vmatprep.mubr.f32.mxu0 0.0
      %v513 = vand.u32 %v249, 4294901760
      %v514 = vsub.f32 %v249, %v513
      %515 = vmatmul.mubr.f32.gmra.mrb[0].mxu0 %v514
      %v516 = vpop.f32.mrb[0].mxu0
      %v517 = vadd.f32 %v432, %v516
      %v518 = vpop.f32.mrb[0].mxu0
      %519 = vdwg.mxu0
      %520 = vmatprep.subr.mxu0 0.0
      %v521 = vand.u32 %v239, 4294901760
      %522 = vmatpush1.msra.mxu0 %v521
      %523 = vmatprep.subr.mxu0 0.0
      %v524 = vand.u32 %v240, 4294901760
      %525 = vmatpush1.msra.mxu0 %v524
      %526 = vmatprep.subr.mxu0 0.0
      %v527 = vand.u32 %v253, 4294901760
      %528 = vmatpush1.msra.mxu0 %v527
      %529 = vmatprep.subr.mxu0 0.0
      %530 = vmatpush1.msra.mxu0 0.0
      %531 = vmatprep.subr.mxu0 0.0
      %532 = vmatpush1.msra.mxu0 0.0
      %533 = vmatprep.subr.mxu0 0.0
      %534 = vmatpush1.msra.mxu0 0.0
      %535 = vmatprep.subr.mxu0 0.0
      %536 = vmatpush1.msra.mxu0 0.0
      %537 = vmatprep.subr.mxu0 0.0
      %538 = vmatpush1.msra.mxu0 0.0
      %539 = vmatprep.subr.mxu0 0.0
      %540 = vmatpush1.msra.mxu0 0.0
      %541 = vmatprep.subr.mxu0 0.0
      %542 = vmatpush1.msra.mxu0 0.0
      %543 = vmatprep.subr.mxu0 0.0
      %544 = vmatpush1.msra.mxu0 0.0
      %545 = vmatprep.subr.mxu0 0.0
      %546 = vmatpush1.msra.mxu0 0.0
      %547 = vmatprep.subr.mxu0 0.0
      %548 = vmatpush1.msra.mxu0 0.0
      %549 = vmatprep.subr.mxu0 0.0
      %550 = vmatpush1.msra.mxu0 0.0
      %551 = vmatprep.subr.mxu0 0.0
      %552 = vmatpush1.msra.mxu0 0.0
      %553 = vmatprep.subr.mxu0 0.0
      %554 = vmatpush1.msra.mxu0 0.0
      %555 = vmatprep.subr.mxu0 0.0
      %556 = vmatpush1.msra.mxu0 0.0
      %557 = vmatprep.subr.mxu0 0.0
      %558 = vmatpush1.msra.mxu0 0.0
      %559 = vmatprep.subr.mxu0 0.0
      %560 = vmatpush1.msra.mxu0 0.0
      %561 = vmatprep.subr.mxu0 0.0
      %562 = vmatpush1.msra.mxu0 0.0
      %563 = vmatprep.subr.mxu0 0.0
      %564 = vmatpush1.msra.mxu0 0.0
      %565 = vmatprep.subr.mxu0 0.0
      %566 = vmatpush1.msra.mxu0 0.0
      %567 = vmatprep.subr.mxu0 0.0
      %568 = vmatpush1.msra.mxu0 0.0
      %569 = vmatprep.subr.mxu0 0.0
      %570 = vmatpush1.msra.mxu0 0.0
      %571 = vmatprep.subr.mxu0 0.0
      %572 = vmatpush1.msra.mxu0 0.0
      %573 = vmatprep.subr.mxu0 0.0
      %574 = vmatpush1.msra.mxu0 0.0
      %575 = vmatprep.subr.mxu0 0.0
      %576 = vmatpush1.msra.mxu0 0.0
      %577 = vmatprep.subr.mxu0 0.0
      %578 = vmatpush1.msra.mxu0 0.0
      %579 = vmatprep.subr.mxu0 0.0
      %580 = vmatpush1.msra.mxu0 0.0
      %581 = vmatprep.subr.mxu0 0.0
      %582 = vmatpush1.msra.mxu0 0.0
      %583 = vmatprep.subr.mxu0 0.0
      %584 = vmatpush1.msra.mxu0 0.0
      %585 = vmatprep.subr.mxu0 0.0
      %586 = vmatpush1.msra.mxu0 0.0
      %587 = vmatprep.mubr.f32.mxu0 0.0
      %v588 = vand.u32 %v246, 4294901760
      %v589 = vsub.f32 %v246, %v588
      %v590 = vand.u32 %v589, 4294901760
      %591 = vmatmul.mubr.f32.gmra.mrb[0].mxu0 %v590
      %v592 = vpop.f32.mrb[0].mxu0
      %v593 = vadd.f32 %v510, %v592
      %v594 = vpop.f32.mrb[0].mxu0
      %595 = vmatprep.mubr.f32.mxu0 0.0
      %v596 = vand.u32 %v249, 4294901760
      %v597 = vsub.f32 %v249, %v596
      %v598 = vand.u32 %v597, 4294901760
      %599 = vmatmul.mubr.f32.gmra.mrb[0].mxu0 %v598
      %v600 = vpop.f32.mrb[0].mxu0
      %v601 = vadd.f32 %v517, %v600
      %v602 = vpop.f32.mrb[0].mxu0
      %603 = vdwg.mxu0
      %604 = vmatprep.subr.mxu0 0.0
      %v605 = vand.u32 %v239, 4294901760
      %v606 = vsub.f32 %v239, %v605
      %v607 = vand.u32 %v606, 4294901760
      %608 = vmatpush1.msra.mxu0 %v607
      %609 = vmatprep.subr.mxu0 0.0
      %v610 = vand.u32 %v240, 4294901760
      %v611 = vsub.f32 %v240, %v610
      %v612 = vand.u32 %v611, 4294901760
      %613 = vmatpush1.msra.mxu0 %v612
      %614 = vmatprep.subr.mxu0 0.0
      %v615 = vand.u32 %v253, 4294901760
      %v616 = vsub.f32 %v253, %v615
      %v617 = vand.u32 %v616, 4294901760
      %618 = vmatpush1.msra.mxu0 %v617
      %619 = vmatprep.subr.mxu0 0.0
      %620 = vmatpush1.msra.mxu0 0.0
      %621 = vmatprep.subr.mxu0 0.0
      %622 = vmatpush1.msra.mxu0 0.0
      %623 = vmatprep.subr.mxu0 0.0
      %624 = vmatpush1.msra.mxu0 0.0
      %625 = vmatprep.subr.mxu0 0.0
      %626 = vmatpush1.msra.mxu0 0.0
      %627 = vmatprep.subr.mxu0 0.0
      %628 = vmatpush1.msra.mxu0 0.0
      %629 = vmatprep.subr.mxu0 0.0
      %630 = vmatpush1.msra.mxu0 0.0
      %631 = vmatprep.subr.mxu0 0.0
      %632 = vmatpush1.msra.mxu0 0.0
      %633 = vmatprep.subr.mxu0 0.0
      %634 = vmatpush1.msra.mxu0 0.0
      %635 = vmatprep.subr.mxu0 0.0
      %636 = vmatpush1.msra.mxu0 0.0
      %637 = vmatprep.subr.mxu0 0.0
      %638 = vmatpush1.msra.mxu0 0.0
      %639 = vmatprep.subr.mxu0 0.0
      %640 = vmatpush1.msra.mxu0 0.0
      %641 = vmatprep.subr.mxu0 0.0
      %642 = vmatpush1.msra.mxu0 0.0
      %643 = vmatprep.subr.mxu0 0.0
      %644 = vmatpush1.msra.mxu0 0.0
      %645 = vmatprep.subr.mxu0 0.0
      %646 = vmatpush1.msra.mxu0 0.0
      %647 = vmatprep.subr.mxu0 0.0
      %648 = vmatpush1.msra.mxu0 0.0
      %649 = vmatprep.subr.mxu0 0.0
      %650 = vmatpush1.msra.mxu0 0.0
      %651 = vmatprep.subr.mxu0 0.0
      %652 = vmatpush1.msra.mxu0 0.0
      %653 = vmatprep.subr.mxu0 0.0
      %654 = vmatpush1.msra.mxu0 0.0
      %655 = vmatprep.subr.mxu0 0.0
      %656 = vmatpush1.msra.mxu0 0.0
      %657 = vmatprep.subr.mxu0 0.0
      %658 = vmatpush1.msra.mxu0 0.0
      %659 = vmatprep.subr.mxu0 0.0
      %660 = vmatpush1.msra.mxu0 0.0
      %661 = vmatprep.subr.mxu0 0.0
      %662 = vmatpush1.msra.mxu0 0.0
      %663 = vmatprep.subr.mxu0 0.0
      %664 = vmatpush1.msra.mxu0 0.0
      %665 = vmatprep.subr.mxu0 0.0
      %666 = vmatpush1.msra.mxu0 0.0
      %667 = vmatprep.subr.mxu0 0.0
      %668 = vmatpush1.msra.mxu0 0.0
      %669 = vmatprep.subr.mxu0 0.0
      %670 = vmatpush1.msra.mxu0 0.0
      %671 = vmatprep.subr.mxu0 0.0
      %672 = vmatpush1.msra.mxu0 0.0
      %673 = vmatprep.subr.mxu0 0.0
      %674 = vmatpush1.msra.mxu0 0.0
      %675 = vmatprep.subr.mxu0 0.0
      %676 = vmatpush1.msra.mxu0 0.0
      %677 = vmatprep.mubr.f32.mxu0 0.0
      %v678 = vand.u32 %v246, 4294901760
      %679 = vmatmul.mubr.f32.gmra.mrb[0].mxu0 %v678
      %v680 = vpop.f32.mrb[0].mxu0
      %v681 = vadd.f32 %v593, %v680
      %v682 = vpop.f32.mrb[0].mxu0
      %683 = vmatprep.mubr.f32.mxu0 0.0
      %v684 = vand.u32 %v249, 4294901760
      %685 = vmatmul.mubr.f32.gmra.mrb[0].mxu0 %v684
      %v686 = vpop.f32.mrb[0].mxu0
      %v687 = vadd.f32 %v601, %v686
      %v688 = vpop.f32.mrb[0].mxu0
      %689 = vdwg.mxu0
      %690 = vmatprep.subr.mxu0 0.0
      %v691 = vand.u32 %v239, 4294901760
      %692 = vmatpush1.msra.mxu0 %v691
      %693 = vmatprep.subr.mxu0 0.0
      %v694 = vand.u32 %v240, 4294901760
      %695 = vmatpush1.msra.mxu0 %v694
      %696 = vmatprep.subr.mxu0 0.0
      %v697 = vand.u32 %v253, 4294901760
      %698 = vmatpush1.msra.mxu0 %v697
      %699 = vmatprep.subr.mxu0 0.0
      %700 = vmatpush1.msra.mxu0 0.0
      %701 = vmatprep.subr.mxu0 0.0
      %702 = vmatpush1.msra.mxu0 0.0
      %703 = vmatprep.subr.mxu0 0.0
      %704 = vmatpush1.msra.mxu0 0.0
      %705 = vmatprep.subr.mxu0 0.0
      %706 = vmatpush1.msra.mxu0 0.0
      %707 = vmatprep.subr.mxu0 0.0
      %708 = vmatpush1.msra.mxu0 0.0
      %709 = vmatprep.subr.mxu0 0.0
      %710 = vmatpush1.msra.mxu0 0.0
      %711 = vmatprep.subr.mxu0 0.0
      %712 = vmatpush1.msra.mxu0 0.0
      %713 = vmatprep.subr.mxu0 0.0
      %714 = vmatpush1.msra.mxu0 0.0
      %715 = vmatprep.subr.mxu0 0.0
      %716 = vmatpush1.msra.mxu0 0.0
      %717 = vmatprep.subr.mxu0 0.0
      %718 = vmatpush1.msra.mxu0 0.0
      %719 = vmatprep.subr.mxu0 0.0
      %720 = vmatpush1.msra.mxu0 0.0
      %721 = vmatprep.subr.mxu0 0.0
      %722 = vmatpush1.msra.mxu0 0.0
      %723 = vmatprep.subr.mxu0 0.0
      %724 = vmatpush1.msra.mxu0 0.0
      %725 = vmatprep.subr.mxu0 0.0
      %726 = vmatpush1.msra.mxu0 0.0
      %727 = vmatprep.subr.mxu0 0.0
      %728 = vmatpush1.msra.mxu0 0.0
      %729 = vmatprep.subr.mxu0 0.0
      %730 = vmatpush1.msra.mxu0 0.0
      %731 = vmatprep.subr.mxu0 0.0
      %732 = vmatpush1.msra.mxu0 0.0
      %733 = vmatprep.subr.mxu0 0.0
      %734 = vmatpush1.msra.mxu0 0.0
      %735 = vmatprep.subr.mxu0 0.0
      %736 = vmatpush1.msra.mxu0 0.0
      %737 = vmatprep.subr.mxu0 0.0
      %738 = vmatpush1.msra.mxu0 0.0
      %739 = vmatprep.subr.mxu0 0.0
      %740 = vmatpush1.msra.mxu0 0.0
      %741 = vmatprep.subr.mxu0 0.0
      %742 = vmatpush1.msra.mxu0 0.0
      %743 = vmatprep.subr.mxu0 0.0
      %744 = vmatpush1.msra.mxu0 0.0
      %745 = vmatprep.subr.mxu0 0.0
      %746 = vmatpush1.msra.mxu0 0.0
      %747 = vmatprep.subr.mxu0 0.0
      %748 = vmatpush1.msra.mxu0 0.0
      %749 = vmatprep.subr.mxu0 0.0
      %750 = vmatpush1.msra.mxu0 0.0
      %751 = vmatprep.subr.mxu0 0.0
      %752 = vmatpush1.msra.mxu0 0.0
      %753 = vmatprep.subr.mxu0 0.0
      %754 = vmatpush1.msra.mxu0 0.0
      %755 = vmatprep.subr.mxu0 0.0
      %756 = vmatpush1.msra.mxu0 0.0
      %757 = vmatprep.mubr.f32.mxu0 0.0
      %v758 = vand.u32 %v246, 4294901760
      %759 = vmatmul.mubr.f32.gmra.mrb[0].mxu0 %v758
      %v760 = vpop.f32.mrb[0].mxu0
      %v761 = vadd.f32 %v681, %v760
      %v762 = vpop.f32.mrb[0].mxu0
      %763 = vmatprep.mubr.f32.mxu0 0.0
      %v764 = vand.u32 %v249, 4294901760
      %765 = vmatmul.mubr.f32.gmra.mrb[0].mxu0 %v764
      %v766 = vpop.f32.mrb[0].mxu0
      %v767 = vadd.f32 %v687, %v766
      %v768 = vpop.f32.mrb[0].mxu0
      %769 = vdwg.mxu0
      %v770 = vadd.f32 %v242, %v761
      %v771 = vadd.f32 %v243, %v767
      %vm772 = vcmask 261120
      %773 = vst.msk [vmem:[#allocation2] sm:$0xff] %vm772, %v770
      %vm774 = vcmask 253952
      %775 = vst.msk [vmem:[#allocation2 + $0x8] sm:$0x1] %vm774, %v771
      // Predicated region
      $region33: #{tpu_custom_call.1} parent=27 // pred_check
        %p776 = pneg %p210
      $region34: #{tpu_custom_call.1} parent=27 // pred_check_branch
        %778 = sbr.rel (%p776) target = $region36
      $region35: #{tpu_custom_call.1} parent=27 // pred_region
        %v779 = vld [vmem:[#allocation2] sm:$0xff]
        %v780 = vld [vmem:[#allocation2 + $0x8] sm:$0x1]
        %781 = vst.msk [vmem:[%s208] sm:$0xff] %vm772, %v779
        %782 = vst.msk [vmem:[%s208 + $0x8] sm:$0x1] %vm774, %v780
      $region36: #{tpu_custom_call.1} parent=27 // pred_fallthru
        _
      %s783 = smul.u32 2, %s19
      %p784 = scmp.lt.s32.totalorder %s18, 1
      %s785 = scalar_select %p784, %s18, 1
      %p786 = scmp.lt.s32.totalorder %s783, 1
      %s787 = scalar_select %p786, %s783, 1
      %s788 = smul.addr %s785, 2
      %s789 = sadd.s32 %s787, %s788
      %s790 = smul.addr %s789, 8
      %s791 = scalar_lea.vmem %s2, %s790
      // Predicated region
      $region37: #{tpu_custom_call.1} parent=27 // pred_check
        %p792 = pneg %p106
      $region38: #{tpu_custom_call.1} parent=27 // pred_check_branch
        %794 = sbr.rel (%p792) target = $region40
      $region39: #{tpu_custom_call.1} parent=27 // pred_region
        %s795 = smul.u32 2, %s19
      $region40: #{tpu_custom_call.1} parent=27 // pred_fallthru
        _
    $region28: #{tpu_custom_call.1} parent=5 // pred_fallthru
      _
    %p796 = scmp.le.s32.totalorder 2, %s8
    // Predicated region
    $region41: #{tpu_custom_call.1} parent=5 // pred_check
      %p797 = pneg %p796
    $region42: #{tpu_custom_call.1} parent=5 // pred_check_branch
      %799 = sbr.rel (%p797) target = $region44
    $region43: #{tpu_custom_call.1} parent=5 // pred_region
      %s800 = ssub.s32 %s8, 2
      // Predicated region
      $region45: #{tpu_custom_call.1} parent=43 // pred_check
        %p801 = pneg %p112
      $region46: #{tpu_custom_call.1} parent=43 // pred_check_branch
        %803 = sbr.rel (%p801) target = $region48
      $region47: #{tpu_custom_call.1} parent=43 // pred_region
        %s804 = smul.u32 2, %s22
        %p805 = scmp.lt.s32.totalorder %s21, 1
        %s806 = scalar_select %p805, %s21, 1
        %p807 = scmp.lt.s32.totalorder %s804, 1
        %s808 = scalar_select %p807, %s804, 1
        %s809 = smul.addr %s806, 2
        %s810 = sadd.s32 %s808, %s809
        %s811 = smul.addr %s810, 8
        %s812 = scalar_lea.vmem %s2, %s811
      $region48: #{tpu_custom_call.1} parent=43 // pred_fallthru
        _
    $region44: #{tpu_custom_call.1} parent=5 // pred_fallthru
      _
  $region6: #{tpu_custom_call.1} parent=0 // loop_footer
    %s12 = sadd.s32 1, %s8
  $region7: #{tpu_custom_call.1} parent=0 // loop_footer_branch
    %7 = sbr.rel target = $region3
  $region8: #{tpu_custom_call.1} parent=0 // loop_exit
    _

</llo_original>
